<compile_context>
chip_gen: v5e
topology: v5e:2x2
jax: 0.10.0
libtpu: 0.0.40
codegen_flags: <defaults>
</compile_context>

<pallas_src>
import jax
import jax.numpy as jnp
import numpy as np
from jax.experimental import pallas as pl
from jax.experimental.pallas import tpu as pltpu

LN_EPS = 1e-5  # PyTorch nn.LayerNorm default


def _round_up(x, m):
    return (x + m - 1) // m * m


def _vmem_capacity_bytes():
    try:
        return int(pltpu.get_tpu_info().vmem_capacity_bytes)
    except Exception:
        return 64 * 1024 * 1024  # conservative fallback (v7x per-TC VMEM)


_VMEM_CAPACITY = _vmem_capacity_bytes()
# Scoped VMEM limit: ~3/4 of physical, capped at 96 MiB (v5e/v6e -> 96 MiB,
# v7x 64 MiB -> 48 MiB).
_VMEM_LIMIT_BYTES = min((_VMEM_CAPACITY * 3) // 4, 96 * 1024 * 1024)
# Grouping budget leaves ~20% headroom for compiler scratch / regalloc slack.
_VMEM_BUDGET_BYTES = (_VMEM_LIMIT_BYTES * 4) // 5


# ---------------------------------------------------------------------------
# Kernel
# ---------------------------------------------------------------------------
def _rff_block(x, w0_ref, w1_ref, w2_ref, vec_ref, dim):
    """x: f32 (tm, pd_in). Returns f32 (tm, pd). Padded output lanes are zero."""
    vec = vec_ref[...]                       # (8, pd) f32
    b0, b1, b2 = vec[0:1], vec[1:2], vec[2:3]
    gamma, beta = vec[3:4], vec[4:5]

    # MXU: bf16 operands, f32 accumulation.
    h = jnp.dot(x.astype(jnp.bfloat16), w0_ref[...],
                preferred_element_type=jnp.float32) + b0
    a = jnp.maximum(
        jnp.dot(h.astype(jnp.bfloat16), w1_ref[...],
                preferred_element_type=jnp.float32) + b1, 0.0)
    x2 = jnp.dot(a.astype(jnp.bfloat16), w2_ref[...],
                 preferred_element_type=jnp.float32) + b2

    # Residual + LayerNorm over the TRUE feature width `dim`.
    # Padded lanes of h/x2/y are exactly zero (zero-padded weights/biases), so
    # sum(y) and sum(y*y) already equal the true sums -> no mask needed.
    y = h + x2
    inv_dim = 1.0 / dim
    mean = jnp.sum(y, axis=-1, keepdims=True) * inv_dim
    var = jnp.maximum(
        jnp.sum(y * y, axis=-1, keepdims=True) * inv_dim - mean * mean, 0.0)
    yn = (y - mean) * jax.lax.rsqrt(var + LN_EPS)
    # Zero-padded gamma/beta re-zero the padded output lanes.
    return yn * gamma + beta


def _make_chain_kernel(layer_dims, include_final):
    """Fused kernel over [Linear + RFF] layers (+ optional final Linear)."""
    n_layer_refs = 4 * len(layer_dims)

    def kernel(*refs):
        x_ref = refs[0]
        o_ref = refs[-1]
        p = refs[1:-1]

        h = x_ref[...].astype(jnp.float32)
        for li, dim in enumerate(layer_dims):
            w0, w1, w2, vec = p[4 * li:4 * li + 4]
            h = _rff_block(h, w0, w1, w2, vec, dim)

        if include_final:
            wf, bf = p[n_layer_refs], p[n_layer_refs + 1]
            h = jnp.dot(h.astype(jnp.bfloat16), wf[...],
                        preferred_element_type=jnp.float32) + bf[...]

        o_ref[...] = h.astype(o_ref.dtype)

    return kernel


# ---------------------------------------------------------------------------
# pallas_call wrapper (one fused group; params fully resident in VMEM)
# ---------------------------------------------------------------------------
def _chain_call(x, group_flats, group_dims, final_flat, out_pd, out_dtype, tm):
    n_rows, pd_in = x.shape
    assert n_rows % tm == 0 and tm % 8 == 0

    flat = []
    for lf in group_flats:
        flat.extend(lf)
    include_final = final_flat is not None
    if include_final:
        flat.extend(final_flat)

    in_specs = [pl.BlockSpec((tm, pd_in), lambda i: (i, 0))]
    for prm in flat:
        in_specs.append(pl.BlockSpec(prm.shape, lambda i: (0, 0)))

    kernel = _make_chain_kernel(tuple(group_dims), include_final)

    return pl.pallas_call(
        kernel,
        out_shape=jax.ShapeDtypeStruct((n_rows, out_pd), out_dtype),
        grid_spec=pltpu.PrefetchScalarGridSpec(
            num_scalar_prefetch=0,
            grid=(n_rows // tm,),
            in_specs=in_specs,
            out_specs=pl.BlockSpec((tm, out_pd), lambda i: (i, 0)),
        ),
        compiler_params=pltpu.CompilerParams(
            dimension_semantics=("parallel",),
            vmem_limit_bytes=_VMEM_LIMIT_BYTES),
    )(x, *flat)


# ---------------------------------------------------------------------------
# VMEM budgeting & tiling helpers
# ---------------------------------------------------------------------------
def _group_bytes(pd_in, layer_pds, tm):
    """Conservative VMEM estimate for one fused group (counts double buffers)."""
    max_pd = max([pd_in] + list(layer_pds))
    out_pd = layer_pds[-1] if layer_pds else pd_in
    b = 2 * tm * pd_in * 2                    # x block, bf16, 2 pipeline buffers
    b += 2 * tm * out_pd * 4                  # out block, worst-case f32, 2 bufs
    b += 6 * tm * max_pd * 4                  # live f32 activation temps
    pprev = pd_in
    for pd in layer_pds:
        b += 2 * 2 * (pprev * pd + 2 * pd * pd)   # bf16 weights, 2 buffers each
        b += 2 * 8 * pd * 4                       # packed (8, pd) f32 vectors
        pprev = pd
    return b


def _final_extra_bytes(pd_prev, pd_out, tm):
    return 2 * 2 * pd_prev * pd_out + 2 * 8 * pd_out * 4 + 2 * tm * pd_out * 4


def _choose_tm(n_rows, max_tm):
    """Row tile: big, low padding waste, >=2 grid steps for megacore parts."""
    n8 = _round_up(max(n_rows, 8), 8)
    if n8 <= 16:
        return n8                              # single tile == full padded rows
    tm = 16                                    # bf16-friendly (16, 128) minimum
    t = 16
    while t * 2 <= max_tm:
        t *= 2
        if _round_up(n8, t) - n8 <= max(n8 // 8, 16):   # <=~12.5% padding waste
            tm = t
    # Give v7x's two TensorCores at least two grid steps on large inputs.
    if n8 > 128 and _round_up(n8, tm) // tm == 1:
        tm = min(tm, _round_up((n8 + 1) // 2, 16))
    return tm


# ---------------------------------------------------------------------------
# Parameter construction (deterministic, synthetic; PyTorch-native layouts)
# ---------------------------------------------------------------------------
def init_mlp_params(key, input_dim, output_dim, hidden_dims):
    params = []
    d_in = input_dim
    for dim in hidden_dims:
        keys = jax.random.split(key, 7)
        key = keys[0]
        layer = {
            "w0": 0.1 * jax.random.normal(keys[1], (dim, d_in), jnp.float32),
            "b0": 0.1 * jax.random.normal(keys[2], (dim,), jnp.float32),
            "w1": 0.1 * jax.random.normal(keys[3], (dim, dim), jnp.float32),
            "b1": 0.1 * jax.random.normal(keys[4], (dim,), jnp.float32),
            "w2": 0.1 * jax.random.normal(keys[5], (dim, dim), jnp.float32),
            "b2": 0.1 * jax.random.normal(keys[6], (dim,), jnp.float32),
            "gamma": jnp.ones((dim,), jnp.float32),
            "beta": jnp.zeros((dim,), jnp.float32),
        }
        params.append(layer)
        d_in = dim
    keys = jax.random.split(key, 3)
    final = {
        "w": 0.1 * jax.random.normal(keys[1], (output_dim, d_in), jnp.float32),
        "b": 0.1 * jax.random.normal(keys[2], (output_dim,), jnp.float32),
    }
    return params, final


def _pad_mat(w, out_pad, in_pad):
    o, i = w.shape
    return jnp.pad(w, ((0, out_pad - o), (0, in_pad - i)))


def _pad_row(v, pad):
    return jnp.pad(v.astype(jnp.float32), (0, pad - v.shape[0])).reshape(1, pad)


def _pack_vectors(layer, dim, pd):
    vec = jnp.zeros((8, pd), jnp.float32)
    vec = vec.at[0, :dim].set(layer["b0"].astype(jnp.float32))
    vec = vec.at[1, :dim].set(layer["b1"].astype(jnp.float32))
    vec = vec.at[2, :dim].set(layer["b2"].astype(jnp.float32))
    vec = vec.at[3, :dim].set(layer["gamma"].astype(jnp.float32))
    vec = vec.at[4, :dim].set(layer["beta"].astype(jnp.float32))
    return vec


# ---------------------------------------------------------------------------
# Forward
# ---------------------------------------------------------------------------
@jax.jit
def mlp_forward(x, hidden_params, final_params):
    lead_shape = x.shape[:-1]
    d_in = x.shape[-1]
    h2d = x.reshape(-1, d_in)
    n_rows = h2d.shape[0]

    pd_in = _round_up(d_in, 128)
    dims = [layer["w0"].shape[0] for layer in hidden_params]
    pds = [_round_up(d, 128) for d in dims]
    out_dim = final_params["w"].shape[0]
    pd_out = _round_up(out_dim, 128)

    # Row tile: 512 on 128 MiB-VMEM parts with small feature dims, else 256;
    # then adapt to the actual row count.
    max_pd = max([pd_in, pd_out] + pds)
    max_tm = 512 if (_VMEM_CAPACITY >= 100 * 1024 * 1024
                     and max_pd <= 512) else 256
    tm = _choose_tm(n_rows, max_tm)
    rows_pad = _round_up(n_rows, tm)

    # Input: pad to (rows_pad, pd_in) and store bf16 (matmul operands are bf16
    # anyway; halves the x-block DMA and its double buffer).
    h = jnp.pad(h2d.astype(jnp.float32),
                ((0, rows_pad - n_rows), (0, pd_in - d_in))).astype(jnp.bfloat16)

    # Pre-transpose to (in, out), pad feature dims to 128-multiples, cast
    # weights to bf16 once; pack the five per-layer vectors into one (8, pd).
    prepped = []
    pd_prev = pd_in
    for layer, dim, pd in zip(hidden_params, dims, pds):
        flat = (
            _pad_mat(layer["w0"], pd, pd_prev).T.astype(jnp.bfloat16),
            _pad_mat(layer["w1"], pd, pd).T.astype(jnp.bfloat16),
            _pad_mat(layer["w2"], pd, pd).T.astype(jnp.bfloat16),
            _pack_vectors(layer, dim, pd),
        )
        prepped.append((dim, pd, flat))
        pd_prev = pd

    final_flat = (
        _pad_mat(final_params["w"], pd_out, pd_prev).T.astype(jnp.bfloat16),
        _pad_row(final_params["b"], pd_out),
    )

    # Greedily group layers under the VMEM budget (weights double-buffered,
    # plus x/out pipeline buffers and f32 activation temps).
    groups = []
    cur, cur_pd_in = [], pd_in
    for desc in prepped:
        trial_pds = [d[1] for d in cur] + [desc[1]]
        if cur and _group_bytes(cur_pd_in, trial_pds, tm) > _VMEM_BUDGET_BYTES:
            groups.append((cur_pd_in, cur))
            cur_pd_in = cur[-1][1]
            cur = [desc]
        else:
            cur.append(desc)
    groups.append((cur_pd_in, cur))

    last_pd_in, last_layers = groups[-1]
    last_pds = [d[1] for d in last_layers]
    fuse_final = (_group_bytes(last_pd_in, last_pds, tm)
                  + _final_extra_bytes(last_pds[-1] if last_pds else last_pd_in,
                                       pd_out, tm)
                  <= _VMEM_BUDGET_BYTES)

    for gi, (_, g_layers) in enumerate(groups):
        g_dims = tuple(d[0] for d in g_layers)
        g_flats = [d[2] for d in g_layers]
        if gi == len(groups) - 1 and fuse_final:
            h = _chain_call(h, g_flats, g_dims, final_flat, pd_out,
                            jnp.float32, tm)
        else:
            # Inter-group activations stay bf16 -> half the HBM traffic.
            h = _chain_call(h, g_flats, g_dims, None, g_layers[-1][1],
                            jnp.bfloat16, tm)
    if not fuse_final:
        h = _chain_call(h, [], (), final_flat, pd_out, jnp.float32, tm)

    h = h[:n_rows, :out_dim]
    return h.reshape(*lead_shape, out_dim)


# ---------------------------------------------------------------------------
# Pure-JAX reference (PyTorch forward in eval mode, with the same bf16 matmul
# operands / f32 accumulation the kernel uses)
# ---------------------------------------------------------------------------
def _bf16_matmul(a, b):
    return jnp.dot(a.astype(jnp.bfloat16), b.astype(jnp.bfloat16),
                   preferred_element_type=jnp.float32)


def mlp_reference(x, hidden_params, final_params):
    h = x.astype(jnp.float32)
    for layer in hidden_params:
        h0 = _bf16_matmul(h, layer["w0"].T) + layer["b0"]
        a = jnp.maximum(_bf16_matmul(h0, layer["w1"].T) + layer["b1"], 0.0)
        x2 = _bf16_matmul(a, layer["w2"].T) + layer["b2"]
        y = h0 + x2
        mean = jnp.mean(y, axis=-1, keepdims=True)
        var = jnp.mean((y - mean) ** 2, axis=-1, keepdims=True)
        h = ((y - mean) * jax.lax.rsqrt(var + LN_EPS) * layer["gamma"]
             + layer["beta"])
    return _bf16_matmul(h, final_params["w"].T) + final_params["b"]


if __name__ == "__main__":
    key = jax.random.PRNGKey(0)
    k_x, k_p = jax.random.split(key)

    batch, seq = 2, 8
    input_dim, output_dim = 32, 16
    hidden_dims = (64, 48)

    x = jax.random.normal(k_x, (batch, seq, input_dim), jnp.float32)
    hidden_params, final_params = init_mlp_params(k_p, input_dim, output_dim,
                                                  hidden_dims)

    out = mlp_forward(x, hidden_params, final_params)
    out = jax.block_until_ready(out)

    ref = mlp_reference(x, hidden_params, final_params)
    assert out.shape == (batch, seq, output_dim)
    np.testing.assert_allclose(np.asarray(out), np.asarray(ref),
                               rtol=2e-3, atol=2e-3)
    print("KERNEL_OK")
</pallas_src>

<mosaic_0001>
module attributes {stable_mosaic.version = 11 : i64} {
  func.func @kernel(%arg0: i32, %arg1: memref<16x128xbf16, #tpu.memory_space<vmem>>, %arg2: memref<128x128xbf16, #tpu.memory_space<vmem>>, %arg3: memref<128x128xbf16, #tpu.memory_space<vmem>>, %arg4: memref<128x128xbf16, #tpu.memory_space<vmem>>, %arg5: memref<8x128xf32, #tpu.memory_space<vmem>>, %arg6: memref<128x128xbf16, #tpu.memory_space<vmem>>, %arg7: memref<128x128xbf16, #tpu.memory_space<vmem>>, %arg8: memref<128x128xbf16, #tpu.memory_space<vmem>>, %arg9: memref<8x128xf32, #tpu.memory_space<vmem>>, %arg10: memref<128x128xbf16, #tpu.memory_space<vmem>>, %arg11: memref<1x128xf32, #tpu.memory_space<vmem>>, %arg12: memref<16x128xf32, #tpu.memory_space<vmem>>) attributes {dimension_semantics = [#tpu.dimension_semantics<parallel>], iteration_bounds = array<i64: 1>, scalar_prefetch = 0 : i64, scratch_operands = 0 : i64, tpu.core_type = #tpu.core_type<tc>, window_params = [{transform_indices = @transform_0, window_bounds = array<i64: 16, 128>}, {pipeline_mode = #tpu.pipeline_mode<synchronous>, transform_indices = @transform_1, window_bounds = array<i64: 128, 128>}, {pipeline_mode = #tpu.pipeline_mode<synchronous>, transform_indices = @transform_2, window_bounds = array<i64: 128, 128>}, {pipeline_mode = #tpu.pipeline_mode<synchronous>, transform_indices = @transform_3, window_bounds = array<i64: 128, 128>}, {pipeline_mode = #tpu.pipeline_mode<synchronous>, transform_indices = @transform_4, window_bounds = array<i64: 8, 128>}, {pipeline_mode = #tpu.pipeline_mode<synchronous>, transform_indices = @transform_5, window_bounds = array<i64: 128, 128>}, {pipeline_mode = #tpu.pipeline_mode<synchronous>, transform_indices = @transform_6, window_bounds = array<i64: 128, 128>}, {pipeline_mode = #tpu.pipeline_mode<synchronous>, transform_indices = @transform_7, window_bounds = array<i64: 128, 128>}, {pipeline_mode = #tpu.pipeline_mode<synchronous>, transform_indices = @transform_8, window_bounds = array<i64: 8, 128>}, {pipeline_mode = #tpu.pipeline_mode<synchronous>, transform_indices = @transform_9, window_bounds = array<i64: 128, 128>}, {pipeline_mode = #tpu.pipeline_mode<synchronous>, transform_indices = @transform_10, window_bounds = array<i64: 1, 128>}, {transform_indices = @transform_11, window_bounds = array<i64: 16, 128>}]} {
    %c0 = arith.constant 0 : index
    %c0_0 = arith.constant 0 : index
    %0 = vector.load %arg1[%c0, %c0_0] : memref<16x128xbf16, #tpu.memory_space<vmem>>, vector<16x128xbf16>
    %1 = arith.extf %0 : vector<16x128xbf16> to vector<16x128xf32>
    %c0_1 = arith.constant 0 : index
    %c0_2 = arith.constant 0 : index
    %2 = vector.load %arg5[%c0_1, %c0_2] : memref<8x128xf32, #tpu.memory_space<vmem>>, vector<8x128xf32>
    %3 = vector.extract_strided_slice %2 {offsets = [0, 0], sizes = [1, 128], strides = [1, 1]} : vector<8x128xf32> to vector<1x128xf32>
    %4 = vector.extract_strided_slice %2 {offsets = [1, 0], sizes = [1, 128], strides = [1, 1]} : vector<8x128xf32> to vector<1x128xf32>
    %5 = vector.extract_strided_slice %2 {offsets = [2, 0], sizes = [1, 128], strides = [1, 1]} : vector<8x128xf32> to vector<1x128xf32>
    %6 = vector.extract_strided_slice %2 {offsets = [3, 0], sizes = [1, 128], strides = [1, 1]} : vector<8x128xf32> to vector<1x128xf32>
    %7 = vector.extract_strided_slice %2 {offsets = [4, 0], sizes = [1, 128], strides = [1, 1]} : vector<8x128xf32> to vector<1x128xf32>
    %8 = arith.truncf %1 : vector<16x128xf32> to vector<16x128xbf16>
    %c0_3 = arith.constant 0 : index
    %c0_4 = arith.constant 0 : index
    %9 = vector.load %arg2[%c0_3, %c0_4] : memref<128x128xbf16, #tpu.memory_space<vmem>>, vector<128x128xbf16>
    %cst = arith.constant dense<0.000000e+00> : vector<16x128xf32>
    %10 = tpu.matmul %8, %9, %cst {dimension_numbers = #tpu.dot_dimension_numbers<[1], [0], [0], [1], [0, 0, 1, 1], [], []>} : vector<16x128xbf16>, vector<128x128xbf16>, vector<16x128xf32> -> vector<16x128xf32>
    %11 = vector.broadcast %3 : vector<1x128xf32> to vector<16x128xf32>
    %12 = arith.addf %10, %11 : vector<16x128xf32>
    %13 = arith.truncf %12 : vector<16x128xf32> to vector<16x128xbf16>
    %c0_5 = arith.constant 0 : index
    %c0_6 = arith.constant 0 : index
    %14 = vector.load %arg3[%c0_5, %c0_6] : memref<128x128xbf16, #tpu.memory_space<vmem>>, vector<128x128xbf16>
    %cst_7 = arith.constant dense<0.000000e+00> : vector<16x128xf32>
    %15 = tpu.matmul %13, %14, %cst_7 {dimension_numbers = #tpu.dot_dimension_numbers<[1], [0], [0], [1], [0, 0, 1, 1], [], []>} : vector<16x128xbf16>, vector<128x128xbf16>, vector<16x128xf32> -> vector<16x128xf32>
    %16 = vector.broadcast %4 : vector<1x128xf32> to vector<16x128xf32>
    %17 = arith.addf %15, %16 : vector<16x128xf32>
    %cst_8 = arith.constant 0.000000e+00 : f32
    %18 = vector.broadcast %cst_8 : f32 to vector<16x128xf32>
    %19 = arith.maximumf %17, %18 : vector<16x128xf32>
    %20 = arith.truncf %19 : vector<16x128xf32> to vector<16x128xbf16>
    %c0_9 = arith.constant 0 : index
    %c0_10 = arith.constant 0 : index
    %21 = vector.load %arg4[%c0_9, %c0_10] : memref<128x128xbf16, #tpu.memory_space<vmem>>, vector<128x128xbf16>
    %cst_11 = arith.constant dense<0.000000e+00> : vector<16x128xf32>
    %22 = tpu.matmul %20, %21, %cst_11 {dimension_numbers = #tpu.dot_dimension_numbers<[1], [0], [0], [1], [0, 0, 1, 1], [], []>} : vector<16x128xbf16>, vector<128x128xbf16>, vector<16x128xf32> -> vector<16x128xf32>
    %23 = vector.broadcast %5 : vector<1x128xf32> to vector<16x128xf32>
    %24 = arith.addf %22, %23 : vector<16x128xf32>
    %25 = arith.addf %12, %24 : vector<16x128xf32>
    %cst_12 = arith.constant dense<0.000000e+00> : vector<16xf32>
    %26 = vector.multi_reduction <add>, %25, %cst_12 [1] : vector<16x128xf32> to vector<16xf32>
    %27 = vector.shape_cast %26 : vector<16xf32> to vector<16x1xf32>
    %cst_13 = arith.constant 1.562500e-02 : f32
    %28 = vector.broadcast %cst_13 : f32 to vector<16x1xf32>
    %29 = arith.mulf %27, %28 : vector<16x1xf32>
    %30 = arith.mulf %25, %25 : vector<16x128xf32>
    %cst_14 = arith.constant dense<0.000000e+00> : vector<16xf32>
    %31 = vector.multi_reduction <add>, %30, %cst_14 [1] : vector<16x128xf32> to vector<16xf32>
    %32 = vector.shape_cast %31 : vector<16xf32> to vector<16x1xf32>
    %cst_15 = arith.constant 1.562500e-02 : f32
    %33 = vector.broadcast %cst_15 : f32 to vector<16x1xf32>
    %34 = arith.mulf %32, %33 : vector<16x1xf32>
    %35 = arith.mulf %29, %29 : vector<16x1xf32>
    %36 = arith.subf %34, %35 : vector<16x1xf32>
    %cst_16 = arith.constant 0.000000e+00 : f32
    %37 = vector.broadcast %cst_16 : f32 to vector<16x1xf32>
    %38 = arith.maximumf %36, %37 : vector<16x1xf32>
    %39 = vector.broadcast %29 : vector<16x1xf32> to vector<16x128xf32>
    %40 = arith.subf %25, %39 : vector<16x128xf32>
    %cst_17 = arith.constant 9.99999974E-6 : f32
    %41 = vector.broadcast %cst_17 : f32 to vector<16x1xf32>
    %42 = arith.addf %38, %41 : vector<16x1xf32>
    %43 = math.rsqrt %42 : vector<16x1xf32>
    %44 = vector.broadcast %43 : vector<16x1xf32> to vector<16x128xf32>
    %45 = arith.mulf %40, %44 : vector<16x128xf32>
    %46 = vector.broadcast %6 : vector<1x128xf32> to vector<16x128xf32>
    %47 = arith.mulf %45, %46 : vector<16x128xf32>
    %48 = vector.broadcast %7 : vector<1x128xf32> to vector<16x128xf32>
    %49 = arith.addf %47, %48 : vector<16x128xf32>
    %c0_18 = arith.constant 0 : index
    %c0_19 = arith.constant 0 : index
    %50 = vector.load %arg9[%c0_18, %c0_19] : memref<8x128xf32, #tpu.memory_space<vmem>>, vector<8x128xf32>
    %51 = vector.extract_strided_slice %50 {offsets = [0, 0], sizes = [1, 128], strides = [1, 1]} : vector<8x128xf32> to vector<1x128xf32>
    %52 = vector.extract_strided_slice %50 {offsets = [1, 0], sizes = [1, 128], strides = [1, 1]} : vector<8x128xf32> to vector<1x128xf32>
    %53 = vector.extract_strided_slice %50 {offsets = [2, 0], sizes = [1, 128], strides = [1, 1]} : vector<8x128xf32> to vector<1x128xf32>
    %54 = vector.extract_strided_slice %50 {offsets = [3, 0], sizes = [1, 128], strides = [1, 1]} : vector<8x128xf32> to vector<1x128xf32>
    %55 = vector.extract_strided_slice %50 {offsets = [4, 0], sizes = [1, 128], strides = [1, 1]} : vector<8x128xf32> to vector<1x128xf32>
    %56 = arith.truncf %49 : vector<16x128xf32> to vector<16x128xbf16>
    %c0_20 = arith.constant 0 : index
    %c0_21 = arith.constant 0 : index
    %57 = vector.load %arg6[%c0_20, %c0_21] : memref<128x128xbf16, #tpu.memory_space<vmem>>, vector<128x128xbf16>
    %cst_22 = arith.constant dense<0.000000e+00> : vector<16x128xf32>
    %58 = tpu.matmul %56, %57, %cst_22 {dimension_numbers = #tpu.dot_dimension_numbers<[1], [0], [0], [1], [0, 0, 1, 1], [], []>} : vector<16x128xbf16>, vector<128x128xbf16>, vector<16x128xf32> -> vector<16x128xf32>
    %59 = vector.broadcast %51 : vector<1x128xf32> to vector<16x128xf32>
    %60 = arith.addf %58, %59 : vector<16x128xf32>
    %61 = arith.truncf %60 : vector<16x128xf32> to vector<16x128xbf16>
    %c0_23 = arith.constant 0 : index
    %c0_24 = arith.constant 0 : index
    %62 = vector.load %arg7[%c0_23, %c0_24] : memref<128x128xbf16, #tpu.memory_space<vmem>>, vector<128x128xbf16>
    %cst_25 = arith.constant dense<0.000000e+00> : vector<16x128xf32>
    %63 = tpu.matmul %61, %62, %cst_25 {dimension_numbers = #tpu.dot_dimension_numbers<[1], [0], [0], [1], [0, 0, 1, 1], [], []>} : vector<16x128xbf16>, vector<128x128xbf16>, vector<16x128xf32> -> vector<16x128xf32>
    %64 = vector.broadcast %52 : vector<1x128xf32> to vector<16x128xf32>
    %65 = arith.addf %63, %64 : vector<16x128xf32>
    %cst_26 = arith.constant 0.000000e+00 : f32
    %66 = vector.broadcast %cst_26 : f32 to vector<16x128xf32>
    %67 = arith.maximumf %65, %66 : vector<16x128xf32>
    %68 = arith.truncf %67 : vector<16x128xf32> to vector<16x128xbf16>
    %c0_27 = arith.constant 0 : index
    %c0_28 = arith.constant 0 : index
    %69 = vector.load %arg8[%c0_27, %c0_28] : memref<128x128xbf16, #tpu.memory_space<vmem>>, vector<128x128xbf16>
    %cst_29 = arith.constant dense<0.000000e+00> : vector<16x128xf32>
    %70 = tpu.matmul %68, %69, %cst_29 {dimension_numbers = #tpu.dot_dimension_numbers<[1], [0], [0], [1], [0, 0, 1, 1], [], []>} : vector<16x128xbf16>, vector<128x128xbf16>, vector<16x128xf32> -> vector<16x128xf32>
    %71 = vector.broadcast %53 : vector<1x128xf32> to vector<16x128xf32>
    %72 = arith.addf %70, %71 : vector<16x128xf32>
    %73 = arith.addf %60, %72 : vector<16x128xf32>
    %cst_30 = arith.constant dense<0.000000e+00> : vector<16xf32>
    %74 = vector.multi_reduction <add>, %73, %cst_30 [1] : vector<16x128xf32> to vector<16xf32>
    %75 = vector.shape_cast %74 : vector<16xf32> to vector<16x1xf32>
    %cst_31 = arith.constant 0.020833334 : f32
    %76 = vector.broadcast %cst_31 : f32 to vector<16x1xf32>
    %77 = arith.mulf %75, %76 : vector<16x1xf32>
    %78 = arith.mulf %73, %73 : vector<16x128xf32>
    %cst_32 = arith.constant dense<0.000000e+00> : vector<16xf32>
    %79 = vector.multi_reduction <add>, %78, %cst_32 [1] : vector<16x128xf32> to vector<16xf32>
    %80 = vector.shape_cast %79 : vector<16xf32> to vector<16x1xf32>
    %cst_33 = arith.constant 0.020833334 : f32
    %81 = vector.broadcast %cst_33 : f32 to vector<16x1xf32>
    %82 = arith.mulf %80, %81 : vector<16x1xf32>
    %83 = arith.mulf %77, %77 : vector<16x1xf32>
    %84 = arith.subf %82, %83 : vector<16x1xf32>
    %cst_34 = arith.constant 0.000000e+00 : f32
    %85 = vector.broadcast %cst_34 : f32 to vector<16x1xf32>
    %86 = arith.maximumf %84, %85 : vector<16x1xf32>
    %87 = vector.broadcast %77 : vector<16x1xf32> to vector<16x128xf32>
    %88 = arith.subf %73, %87 : vector<16x128xf32>
    %cst_35 = arith.constant 9.99999974E-6 : f32
    %89 = vector.broadcast %cst_35 : f32 to vector<16x1xf32>
    %90 = arith.addf %86, %89 : vector<16x1xf32>
    %91 = math.rsqrt %90 : vector<16x1xf32>
    %92 = vector.broadcast %91 : vector<16x1xf32> to vector<16x128xf32>
    %93 = arith.mulf %88, %92 : vector<16x128xf32>
    %94 = vector.broadcast %54 : vector<1x128xf32> to vector<16x128xf32>
    %95 = arith.mulf %93, %94 : vector<16x128xf32>
    %96 = vector.broadcast %55 : vector<1x128xf32> to vector<16x128xf32>
    %97 = arith.addf %95, %96 : vector<16x128xf32>
    %98 = arith.truncf %97 : vector<16x128xf32> to vector<16x128xbf16>
    %c0_36 = arith.constant 0 : index
    %c0_37 = arith.constant 0 : index
    %99 = vector.load %arg10[%c0_36, %c0_37] : memref<128x128xbf16, #tpu.memory_space<vmem>>, vector<128x128xbf16>
    %cst_38 = arith.constant dense<0.000000e+00> : vector<16x128xf32>
    %100 = tpu.matmul %98, %99, %cst_38 {dimension_numbers = #tpu.dot_dimension_numbers<[1], [0], [0], [1], [0, 0, 1, 1], [], []>} : vector<16x128xbf16>, vector<128x128xbf16>, vector<16x128xf32> -> vector<16x128xf32>
    %c0_39 = arith.constant 0 : index
    %c0_40 = arith.constant 0 : index
    %101 = vector.load %arg11[%c0_39, %c0_40] : memref<1x128xf32, #tpu.memory_space<vmem>>, vector<1x128xf32>
    %102 = vector.broadcast %101 : vector<1x128xf32> to vector<16x128xf32>
    %103 = arith.addf %100, %102 : vector<16x128xf32>
    %c0_41 = arith.constant 0 : index
    %c0_42 = arith.constant 0 : index
    %104 = vector.load %arg12[%c0_41, %c0_42] : memref<16x128xf32, #tpu.memory_space<vmem>>, vector<16x128xf32>
    tpu.vector_store %arg12[%c0_41, %c0_42], %103 {strides = array<i32>} : memref<16x128xf32, #tpu.memory_space<vmem>>, vector<16x128xf32>,
    return
  }
  func.func @transform_0(%arg0: i32) -> (i32, i32) {
    %c0_i32 = arith.constant 0 : i32
    %c0_i32_0 = arith.constant 0 : i32
    return %arg0, %c0_i32 : i32, i32
  }
  func.func @transform_1(%arg0: i32) -> (i32, i32) {
    %c0_i32 = arith.constant 0 : i32
    %c0_i32_0 = arith.constant 0 : i32
    %c0_i32_1 = arith.constant 0 : i32
    return %c0_i32, %c0_i32_0 : i32, i32
  }
  func.func @transform_2(%arg0: i32) -> (i32, i32) {
    %c0_i32 = arith.constant 0 : i32
    %c0_i32_0 = arith.constant 0 : i32
    %c0_i32_1 = arith.constant 0 : i32
    return %c0_i32, %c0_i32_0 : i32, i32
  }
  func.func @transform_3(%arg0: i32) -> (i32, i32) {
    %c0_i32 = arith.constant 0 : i32
    %c0_i32_0 = arith.constant 0 : i32
    %c0_i32_1 = arith.constant 0 : i32
    return %c0_i32, %c0_i32_0 : i32, i32
  }
  func.func @transform_4(%arg0: i32) -> (i32, i32) {
    %c0_i32 = arith.constant 0 : i32
    %c0_i32_0 = arith.constant 0 : i32
    %c0_i32_1 = arith.constant 0 : i32
    return %c0_i32, %c0_i32_0 : i32, i32
  }
  func.func @transform_5(%arg0: i32) -> (i32, i32) {
    %c0_i32 = arith.constant 0 : i32
    %c0_i32_0 = arith.constant 0 : i32
    %c0_i32_1 = arith.constant 0 : i32
    return %c0_i32, %c0_i32_0 : i32, i32
  }
  func.func @transform_6(%arg0: i32) -> (i32, i32) {
    %c0_i32 = arith.constant 0 : i32
    %c0_i32_0 = arith.constant 0 : i32
    %c0_i32_1 = arith.constant 0 : i32
    return %c0_i32, %c0_i32_0 : i32, i32
  }
  func.func @transform_7(%arg0: i32) -> (i32, i32) {
    %c0_i32 = arith.constant 0 : i32
    %c0_i32_0 = arith.constant 0 : i32
    %c0_i32_1 = arith.constant 0 : i32
    return %c0_i32, %c0_i32_0 : i32, i32
  }
  func.func @transform_8(%arg0: i32) -> (i32, i32) {
    %c0_i32 = arith.constant 0 : i32
    %c0_i32_0 = arith.constant 0 : i32
    %c0_i32_1 = arith.constant 0 : i32
    return %c0_i32, %c0_i32_0 : i32, i32
  }
  func.func @transform_9(%arg0: i32) -> (i32, i32) {
    %c0_i32 = arith.constant 0 : i32
    %c0_i32_0 = arith.constant 0 : i32
    %c0_i32_1 = arith.constant 0 : i32
    return %c0_i32, %c0_i32_0 : i32, i32
  }
  func.func @transform_10(%arg0: i32) -> (i32, i32) {
    %c0_i32 = arith.constant 0 : i32
    %c0_i32_0 = arith.constant 0 : i32
    %c0_i32_1 = arith.constant 0 : i32
    return %c0_i32, %c0_i32_0 : i32, i32
  }
  func.func @transform_11(%arg0: i32) -> (i32, i32) {
    %c0_i32 = arith.constant 0 : i32
    %c0_i32_0 = arith.constant 0 : i32
    return %arg0, %c0_i32 : i32, i32
  }
}

</mosaic_0001>

<llo_original>
// kernel: mlp_forward.1
$region0: #{mlp_forward.1}
  #allocation0 [shape = 'u32[]', space=smem, size = 0x4, offset = 0x4, fixed_abs, tag = 'smem constant byte address 0x4 - core index']
  #allocation1 [shape = 'u32[72,128]{1,0:T(1,128)}', space=vmem, size = 0x9000, scoped, tag = 'internal scratch']
  %s0 = inlined_call_operand.vmem [shape: bf16[16,128], index: 0, kind: input, shape index: {}]
  %s1 = inlined_call_operand.vmem [shape: bf16[128,128], index: 1, kind: input, shape index: {}]
  %s2 = inlined_call_operand.vmem [shape: bf16[128,128], index: 2, kind: input, shape index: {}]
  %s3 = inlined_call_operand.vmem [shape: bf16[128,128], index: 3, kind: input, shape index: {}]
  %s4 = inlined_call_operand.vmem [shape: f32[8,128], index: 4, kind: input, shape index: {}]
  %s5 = inlined_call_operand.vmem [shape: bf16[128,128], index: 5, kind: input, shape index: {}]
  %s6 = inlined_call_operand.vmem [shape: bf16[128,128], index: 6, kind: input, shape index: {}]
  %s7 = inlined_call_operand.vmem [shape: bf16[128,128], index: 7, kind: input, shape index: {}]
  %s8 = inlined_call_operand.vmem [shape: f32[8,128], index: 8, kind: input, shape index: {}]
  %s9 = inlined_call_operand.vmem [shape: bf16[128,128], index: 9, kind: input, shape index: {}]
  %s10 = inlined_call_operand.vmem [shape: f32[1,128], index: 10, kind: input, shape index: {}]
  %s11 = inlined_call_operand.vmem [shape: f32[16,128], index: 11, kind: output, shape index: {}]
  %s12 = sld [smem:[#allocation0]]
  $region54: #{mlp_forward.1} parent=0
    _
  %s14 = ssub.s32 1, %s12
  %s15 = scalar_select 0, %s14, %s12
  // Predicated region
  $region2: #{mlp_forward.1} parent=0 // pred_check
    _
  $region3: #{mlp_forward.1} parent=0 // pred_check_branch
    %17 = sbr.rel (0) target = $region5
  $region4: #{mlp_forward.1} parent=0 // pred_region
    _
  $region5: #{mlp_forward.1} parent=0 // pred_fallthru
    _
  // Predicated region
  $region6: #{mlp_forward.1} parent=0 // pred_check
    _
  $region7: #{mlp_forward.1} parent=0 // pred_check_branch
    %19 = sbr.rel (0) target = $region9
  $region8: #{mlp_forward.1} parent=0 // pred_region
    _
  $region9: #{mlp_forward.1} parent=0 // pred_fallthru
    _
  // Predicated region
  $region10: #{mlp_forward.1} parent=0 // pred_check
    _
  $region11: #{mlp_forward.1} parent=0 // pred_check_branch
    %21 = sbr.rel (0) target = $region13
  $region12: #{mlp_forward.1} parent=0 // pred_region
    _
  $region13: #{mlp_forward.1} parent=0 // pred_fallthru
    _
  // Predicated region
  $region14: #{mlp_forward.1} parent=0 // pred_check
    _
  $region15: #{mlp_forward.1} parent=0 // pred_check_branch
    %23 = sbr.rel (0) target = $region17
  $region16: #{mlp_forward.1} parent=0 // pred_region
    _
  $region17: #{mlp_forward.1} parent=0 // pred_fallthru
    _
  // Predicated region
  $region18: #{mlp_forward.1} parent=0 // pred_check
    _
  $region19: #{mlp_forward.1} parent=0 // pred_check_branch
    %25 = sbr.rel (0) target = $region21
  $region20: #{mlp_forward.1} parent=0 // pred_region
    _
  $region21: #{mlp_forward.1} parent=0 // pred_fallthru
    _
  // Predicated region
  $region22: #{mlp_forward.1} parent=0 // pred_check
    _
  $region23: #{mlp_forward.1} parent=0 // pred_check_branch
    %27 = sbr.rel (0) target = $region25
  $region24: #{mlp_forward.1} parent=0 // pred_region
    _
  $region25: #{mlp_forward.1} parent=0 // pred_fallthru
    _
  // Predicated region
  $region26: #{mlp_forward.1} parent=0 // pred_check
    _
  $region27: #{mlp_forward.1} parent=0 // pred_check_branch
    %29 = sbr.rel (0) target = $region29
  $region28: #{mlp_forward.1} parent=0 // pred_region
    _
  $region29: #{mlp_forward.1} parent=0 // pred_fallthru
    _
  // Predicated region
  $region30: #{mlp_forward.1} parent=0 // pred_check
    _
  $region31: #{mlp_forward.1} parent=0 // pred_check_branch
    %31 = sbr.rel (0) target = $region33
  $region32: #{mlp_forward.1} parent=0 // pred_region
    _
  $region33: #{mlp_forward.1} parent=0 // pred_fallthru
    _
  // Predicated region
  $region34: #{mlp_forward.1} parent=0 // pred_check
    _
  $region35: #{mlp_forward.1} parent=0 // pred_check_branch
    %33 = sbr.rel (0) target = $region37
  $region36: #{mlp_forward.1} parent=0 // pred_region
    _
  $region37: #{mlp_forward.1} parent=0 // pred_fallthru
    _
  // Predicated region
  $region38: #{mlp_forward.1} parent=0 // pred_check
    _
  $region39: #{mlp_forward.1} parent=0 // pred_check_branch
    %35 = sbr.rel (0) target = $region41
  $region40: #{mlp_forward.1} parent=0 // pred_region
    _
  $region41: #{mlp_forward.1} parent=0 // pred_fallthru
    _
  // Predicated region
  $region42: #{mlp_forward.1} parent=0 // pred_check
    _
  $region43: #{mlp_forward.1} parent=0 // pred_check_branch
    %37 = sbr.rel (0) target = $region45
  $region44: #{mlp_forward.1} parent=0 // pred_region
    _
  $region45: #{mlp_forward.1} parent=0 // pred_fallthru
    _
  %v38 = vld [vmem:[%s0] sm:$0xf]
  %v39 = vld [vmem:[%s0 + $0x4] sm:$0xf]
  %v40 = vld [vmem:[%s4] sm:$0xff]
  %v41 = vld [vmem:[%s1] sm:$0xf]
  %v42 = vld [vmem:[%s1 + $0x4] sm:$0xf]
  %v43 = vld [vmem:[%s1 + $0x8] sm:$0xf]
  %v44 = vld [vmem:[%s1 + $0xc] sm:$0xf]
  %v45 = vld [vmem:[%s1 + $0x10] sm:$0xf]
  %v46 = vld [vmem:[%s1 + $0x14] sm:$0xf]
  %v47 = vld [vmem:[%s1 + $0x18] sm:$0xf]
  %v48 = vld [vmem:[%s1 + $0x1c] sm:$0xf]
  %v49 = vld [vmem:[%s1 + $0x20] sm:$0xf]
  %v50 = vld [vmem:[%s1 + $0x24] sm:$0xf]
  %v51 = vld [vmem:[%s1 + $0x28] sm:$0xf]
  %v52 = vld [vmem:[%s1 + $0x2c] sm:$0xf]
  %v53 = vld [vmem:[%s1 + $0x30] sm:$0xf]
  %v54 = vld [vmem:[%s1 + $0x34] sm:$0xf]
  %v55 = vld [vmem:[%s1 + $0x38] sm:$0xf]
  %v56 = vld [vmem:[%s1 + $0x3c] sm:$0xf]
  %v57 = vperm.slane %v40, 0
  %v60 = vunpack.c.l.b16 %v38
  %v61 = vunpack.c.l.b16 %v39
  %v62 = vpack.c.b16 %v61, %v60
  %v80 = vunpack.c.l.b16 %v41
  %v81 = vunpack.c.l.b16 %v42
  %v82 = vunpack.c.l.b16 %v43
  %v83 = vunpack.c.l.b16 %v44
  %v84 = vunpack.c.l.b16 %v45
  %v85 = vunpack.c.l.b16 %v46
  %v86 = vunpack.c.l.b16 %v47
  %v87 = vunpack.c.l.b16 %v48
  %v88 = vunpack.c.l.b16 %v49
  %v89 = vunpack.c.l.b16 %v50
  %v90 = vunpack.c.l.b16 %v51
  %v91 = vunpack.c.l.b16 %v52
  %v92 = vunpack.c.l.b16 %v53
  %v93 = vunpack.c.l.b16 %v54
  %v94 = vunpack.c.l.b16 %v55
  %v95 = vunpack.c.l.b16 %v56
  %v96 = vpack.c.b16 %v81, %v80
  %v97 = vpack.c.b16 %v83, %v82
  %v98 = vpack.c.b16 %v85, %v84
  %v99 = vpack.c.b16 %v87, %v86
  %v100 = vpack.c.b16 %v89, %v88
  %v101 = vpack.c.b16 %v91, %v90
  %v102 = vpack.c.b16 %v93, %v92
  %v103 = vpack.c.b16 %v95, %v94
  %112 = vmatpush.bf16.msra.mxu0 %v103
  %113 = vmatpush.bf16.msra.mxu0 %v102
  %114 = vmatpush.bf16.msra.mxu0 %v101
  %115 = vmatpush.bf16.msra.mxu0 %v100
  %116 = vmatpush.bf16.msra.mxu0 %v99
  %117 = vmatpush.bf16.msra.mxu0 %v98
  %118 = vmatpush.bf16.msra.mxu0 %v97
  %119 = vmatpush.bf16.msra.mxu0 %v96
  %120 = vmatmul.bf16.gmra.mxu0 %v62
  %v121 = vpop.f32.mrf.mxu0
  %v122 = vadd.f32 %v57, %v121
  %v123 = vpop.f32.mrf.mxu0
  %v124 = vadd.f32 %v57, %v123
  %125 = vdwg.mxu0
  %v126 = vpack.c.bf16 %v124, %v122
  %v127 = vld [vmem:[%s2] sm:$0xf]
  %v128 = vld [vmem:[%s2 + $0x4] sm:$0xf]
  %v129 = vld [vmem:[%s2 + $0x8] sm:$0xf]
  %v130 = vld [vmem:[%s2 + $0xc] sm:$0xf]
  %v131 = vld [vmem:[%s2 + $0x10] sm:$0xf]
  %v132 = vld [vmem:[%s2 + $0x14] sm:$0xf]
  %v133 = vld [vmem:[%s2 + $0x18] sm:$0xf]
  %v134 = vld [vmem:[%s2 + $0x1c] sm:$0xf]
  %v135 = vld [vmem:[%s2 + $0x20] sm:$0xf]
  %v136 = vld [vmem:[%s2 + $0x24] sm:$0xf]
  %v137 = vld [vmem:[%s2 + $0x28] sm:$0xf]
  %v138 = vld [vmem:[%s2 + $0x2c] sm:$0xf]
  %v139 = vld [vmem:[%s2 + $0x30] sm:$0xf]
  %v140 = vld [vmem:[%s2 + $0x34] sm:$0xf]
  %v141 = vld [vmem:[%s2 + $0x38] sm:$0xf]
  %v142 = vld [vmem:[%s2 + $0x3c] sm:$0xf]
  %v143 = vperm.slane %v40, 1
  %v160 = vunpack.c.l.b16 %v127
  %v161 = vunpack.c.l.b16 %v128
  %v162 = vunpack.c.l.b16 %v129
  %v163 = vunpack.c.l.b16 %v130
  %v164 = vunpack.c.l.b16 %v131
  %v165 = vunpack.c.l.b16 %v132
  %v166 = vunpack.c.l.b16 %v133
  %v167 = vunpack.c.l.b16 %v134
  %v168 = vunpack.c.l.b16 %v135
  %v169 = vunpack.c.l.b16 %v136
  %v170 = vunpack.c.l.b16 %v137
  %v171 = vunpack.c.l.b16 %v138
  %v172 = vunpack.c.l.b16 %v139
  %v173 = vunpack.c.l.b16 %v140
  %v174 = vunpack.c.l.b16 %v141
  %v175 = vunpack.c.l.b16 %v142
  %v176 = vpack.c.b16 %v161, %v160
  %v177 = vpack.c.b16 %v163, %v162
  %v178 = vpack.c.b16 %v165, %v164
  %v179 = vpack.c.b16 %v167, %v166
  %v180 = vpack.c.b16 %v169, %v168
  %v181 = vpack.c.b16 %v171, %v170
  %v182 = vpack.c.b16 %v173, %v172
  %v183 = vpack.c.b16 %v175, %v174
  %192 = vmatpush.bf16.msra.mxu0 %v183
  %193 = vmatpush.bf16.msra.mxu0 %v182
  %194 = vmatpush.bf16.msra.mxu0 %v181
  %195 = vmatpush.bf16.msra.mxu0 %v180
  %196 = vmatpush.bf16.msra.mxu0 %v179
  %197 = vmatpush.bf16.msra.mxu0 %v178
  %198 = vmatpush.bf16.msra.mxu0 %v177
  %199 = vmatpush.bf16.msra.mxu0 %v176
  %200 = vmatmul.bf16.gmra.mxu0 %v126
  %v201 = vpop.f32.mrf.mxu0
  %v202 = vadd.f32 %v143, %v201
  %v203 = vpop.f32.mrf.mxu0
  %v204 = vadd.f32 %v143, %v203
  %205 = vdwg.mxu0
  %v206 = vmax.f32 %v202, 0.0
  %v207 = vmax.f32 %v204, 0.0
  %v208 = vpack.c.bf16 %v207, %v206
  %v209 = vld [vmem:[%s3] sm:$0xf]
  %v210 = vld [vmem:[%s3 + $0x4] sm:$0xf]
  %v211 = vld [vmem:[%s3 + $0x8] sm:$0xf]
  %v212 = vld [vmem:[%s3 + $0xc] sm:$0xf]
  %v213 = vld [vmem:[%s3 + $0x10] sm:$0xf]
  %v214 = vld [vmem:[%s3 + $0x14] sm:$0xf]
  %v215 = vld [vmem:[%s3 + $0x18] sm:$0xf]
  %v216 = vld [vmem:[%s3 + $0x1c] sm:$0xf]
  %v217 = vld [vmem:[%s3 + $0x20] sm:$0xf]
  %v218 = vld [vmem:[%s3 + $0x24] sm:$0xf]
  %v219 = vld [vmem:[%s3 + $0x28] sm:$0xf]
  %v220 = vld [vmem:[%s3 + $0x2c] sm:$0xf]
  %v221 = vld [vmem:[%s3 + $0x30] sm:$0xf]
  %v222 = vld [vmem:[%s3 + $0x34] sm:$0xf]
  %v223 = vld [vmem:[%s3 + $0x38] sm:$0xf]
  %v224 = vld [vmem:[%s3 + $0x3c] sm:$0xf]
  %v225 = vperm.slane %v40, 2
  %v242 = vunpack.c.l.b16 %v209
  %v243 = vunpack.c.l.b16 %v210
  %v244 = vunpack.c.l.b16 %v211
  %v245 = vunpack.c.l.b16 %v212
  %v246 = vunpack.c.l.b16 %v213
  %v247 = vunpack.c.l.b16 %v214
  %v248 = vunpack.c.l.b16 %v215
  %v249 = vunpack.c.l.b16 %v216
  %v250 = vunpack.c.l.b16 %v217
  %v251 = vunpack.c.l.b16 %v218
  %v252 = vunpack.c.l.b16 %v219
  %v253 = vunpack.c.l.b16 %v220
  %v254 = vunpack.c.l.b16 %v221
  %v255 = vunpack.c.l.b16 %v222
  %v256 = vunpack.c.l.b16 %v223
  %v257 = vunpack.c.l.b16 %v224
  %v258 = vpack.c.b16 %v243, %v242
  %v259 = vpack.c.b16 %v245, %v244
  %v260 = vpack.c.b16 %v247, %v246
  %v261 = vpack.c.b16 %v249, %v248
  %v262 = vpack.c.b16 %v251, %v250
  %v263 = vpack.c.b16 %v253, %v252
  %v264 = vpack.c.b16 %v255, %v254
  %v265 = vpack.c.b16 %v257, %v256
  %274 = vmatpush.bf16.msra.mxu0 %v265
  %275 = vmatpush.bf16.msra.mxu0 %v264
  %276 = vmatpush.bf16.msra.mxu0 %v263
  %277 = vmatpush.bf16.msra.mxu0 %v262
  %278 = vmatpush.bf16.msra.mxu0 %v261
  %279 = vmatpush.bf16.msra.mxu0 %v260
  %280 = vmatpush.bf16.msra.mxu0 %v259
  %281 = vmatpush.bf16.msra.mxu0 %v258
  %282 = vmatmul.bf16.gmra.mxu0 %v208
  %v283 = vpop.f32.mrf.mxu0
  %v284 = vadd.f32 %v225, %v283
  %v285 = vpop.f32.mrf.mxu0
  %v286 = vadd.f32 %v225, %v285
  %287 = vdwg.mxu0
  %v288 = vadd.f32 %v122, %v284
  %v289 = vadd.f32 %v124, %v286
  %290 = vadd.xlane.f32.xlu0 %v288
  %v291 = vpop.xlane.xlu0 %290
  %292 = vadd.xlane.f32.xlu0 %v289
  %v293 = vpop.xlane.xlu0 %292
  %v294 = vmul.f32 %v291, 0.015625
  %v295 = vmul.f32 %v293, 0.015625
  %v296 = vmul.f32 %v288, %v288
  %v297 = vmul.f32 %v289, %v289
  %298 = vadd.xlane.f32.xlu0 %v296
  %v299 = vpop.xlane.xlu0 %298
  %300 = vadd.xlane.f32.xlu0 %v297
  %v301 = vpop.xlane.xlu0 %300
  %v302 = vmul.f32 %v299, 0.015625
  %v303 = vmul.f32 %v301, 0.015625
  %v304 = vmul.f32 %v294, %v294
  %v305 = vmul.f32 %v295, %v295
  %v306 = vsub.f32 %v302, %v304
  %v307 = vsub.f32 %v303, %v305
  %v308 = vmax.f32 %v306, 0.0
  %v309 = vmax.f32 %v307, 0.0
  %v310 = vsub.f32 %v288, %v294
  %v311 = vsub.f32 %v289, %v295
  %v312 = vadd.f32 %v308, 1e-05
  %v313 = vadd.f32 %v309, 1e-05
  %v314 = vrsqrt.pop %v312
  %v315 = vmul.f32 %v314, %v312
  %v316 = vmul.f32 %v315, %v314
  %v317 = vmul.f32 0.5, %v316
  %v318 = vsub.f32 1.5, %v317
  %v319 = vmul.f32 %v314, %v318
  %vm320 = vweird.f32 %v312
  %vm321 = vweird.f32 %v314
  %vm322 = vmor %vm320, %vm321
  %v323 = vsel %vm322, %v314, %v319
  %v324 = vrsqrt.pop %v313
  %v325 = vmul.f32 %v324, %v313
  %v326 = vmul.f32 %v325, %v324
  %v327 = vmul.f32 0.5, %v326
  %v328 = vsub.f32 1.5, %v327
  %v329 = vmul.f32 %v324, %v328
  %vm330 = vweird.f32 %v313
  %vm331 = vweird.f32 %v324
  %vm332 = vmor %vm330, %vm331
  %v333 = vsel %vm332, %v324, %v329
  %v334 = vmul.f32 %v310, %v323
  %v335 = vmul.f32 %v311, %v333
  %v336 = vperm.slane %v40, 3
  %v337 = vmul.f32 %v334, %v336
  %v338 = vmul.f32 %v335, %v336
  %v339 = vperm.slane %v40, 4
  %v340 = vadd.f32 %v337, %v339
  %v341 = vadd.f32 %v338, %v339
  %v342 = vld [vmem:[%s8] sm:$0xff]
  %v343 = vpack.c.bf16 %v341, %v340
  %v344 = vld [vmem:[%s5] sm:$0xf]
  %v345 = vld [vmem:[%s5 + $0x4] sm:$0xf]
  %v346 = vld [vmem:[%s5 + $0x8] sm:$0xf]
  %v347 = vld [vmem:[%s5 + $0xc] sm:$0xf]
  %v348 = vld [vmem:[%s5 + $0x10] sm:$0xf]
  %v349 = vld [vmem:[%s5 + $0x14] sm:$0xf]
  %v350 = vld [vmem:[%s5 + $0x18] sm:$0xf]
  %v351 = vld [vmem:[%s5 + $0x1c] sm:$0xf]
  %v352 = vld [vmem:[%s5 + $0x20] sm:$0xf]
  %v353 = vld [vmem:[%s5 + $0x24] sm:$0xf]
  %v354 = vld [vmem:[%s5 + $0x28] sm:$0xf]
  %v355 = vld [vmem:[%s5 + $0x2c] sm:$0xf]
  %v356 = vld [vmem:[%s5 + $0x30] sm:$0xf]
  %v357 = vld [vmem:[%s5 + $0x34] sm:$0xf]
  %v358 = vld [vmem:[%s5 + $0x38] sm:$0xf]
  %v359 = vld [vmem:[%s5 + $0x3c] sm:$0xf]
  %v360 = vperm.slane %v342, 0
  %v377 = vunpack.c.l.b16 %v344
  %v378 = vunpack.c.l.b16 %v345
  %v379 = vunpack.c.l.b16 %v346
  %v380 = vunpack.c.l.b16 %v347
  %v381 = vunpack.c.l.b16 %v348
  %v382 = vunpack.c.l.b16 %v349
  %v383 = vunpack.c.l.b16 %v350
  %v384 = vunpack.c.l.b16 %v351
  %v385 = vunpack.c.l.b16 %v352
  %v386 = vunpack.c.l.b16 %v353
  %v387 = vunpack.c.l.b16 %v354
  %v388 = vunpack.c.l.b16 %v355
  %v389 = vunpack.c.l.b16 %v356
  %v390 = vunpack.c.l.b16 %v357
  %v391 = vunpack.c.l.b16 %v358
  %v392 = vunpack.c.l.b16 %v359
  %v393 = vpack.c.b16 %v378, %v377
  %v394 = vpack.c.b16 %v380, %v379
  %v395 = vpack.c.b16 %v382, %v381
  %v396 = vpack.c.b16 %v384, %v383
  %v397 = vpack.c.b16 %v386, %v385
  %v398 = vpack.c.b16 %v388, %v387
  %v399 = vpack.c.b16 %v390, %v389
  %v400 = vpack.c.b16 %v392, %v391
  %409 = vmatpush.bf16.msra.mxu0 %v400
  %410 = vmatpush.bf16.msra.mxu0 %v399
  %411 = vmatpush.bf16.msra.mxu0 %v398
  %412 = vmatpush.bf16.msra.mxu0 %v397
  %413 = vmatpush.bf16.msra.mxu0 %v396
  %414 = vmatpush.bf16.msra.mxu0 %v395
  %415 = vmatpush.bf16.msra.mxu0 %v394
  %416 = vmatpush.bf16.msra.mxu0 %v393
  %417 = vmatmul.bf16.gmra.mxu0 %v343
  %v418 = vpop.f32.mrf.mxu0
  %v419 = vadd.f32 %v360, %v418
  %v420 = vpop.f32.mrf.mxu0
  %v421 = vadd.f32 %v360, %v420
  %422 = vdwg.mxu0
  %v423 = vpack.c.bf16 %v421, %v419
  %v424 = vld [vmem:[%s6] sm:$0xf]
  %v425 = vld [vmem:[%s6 + $0x4] sm:$0xf]
  %v426 = vld [vmem:[%s6 + $0x8] sm:$0xf]
  %v427 = vld [vmem:[%s6 + $0xc] sm:$0xf]
  %v428 = vld [vmem:[%s6 + $0x10] sm:$0xf]
  %v429 = vld [vmem:[%s6 + $0x14] sm:$0xf]
  %v430 = vld [vmem:[%s6 + $0x18] sm:$0xf]
  %v431 = vld [vmem:[%s6 + $0x1c] sm:$0xf]
  %v432 = vld [vmem:[%s6 + $0x20] sm:$0xf]
  %v433 = vld [vmem:[%s6 + $0x24] sm:$0xf]
  %v434 = vld [vmem:[%s6 + $0x28] sm:$0xf]
  %v435 = vld [vmem:[%s6 + $0x2c] sm:$0xf]
  %v436 = vld [vmem:[%s6 + $0x30] sm:$0xf]
  %v437 = vld [vmem:[%s6 + $0x34] sm:$0xf]
  %v438 = vld [vmem:[%s6 + $0x38] sm:$0xf]
  %v439 = vld [vmem:[%s6 + $0x3c] sm:$0xf]
  %v440 = vperm.slane %v342, 1
  %v457 = vunpack.c.l.b16 %v424
  %v458 = vunpack.c.l.b16 %v425
  %v459 = vunpack.c.l.b16 %v426
  %v460 = vunpack.c.l.b16 %v427
  %v461 = vunpack.c.l.b16 %v428
  %v462 = vunpack.c.l.b16 %v429
  %v463 = vunpack.c.l.b16 %v430
  %v464 = vunpack.c.l.b16 %v431
  %v465 = vunpack.c.l.b16 %v432
  %v466 = vunpack.c.l.b16 %v433
  %v467 = vunpack.c.l.b16 %v434
  %v468 = vunpack.c.l.b16 %v435
  %v469 = vunpack.c.l.b16 %v436
  %v470 = vunpack.c.l.b16 %v437
  %v471 = vunpack.c.l.b16 %v438
  %v472 = vunpack.c.l.b16 %v439
  %v473 = vpack.c.b16 %v458, %v457
  %v474 = vpack.c.b16 %v460, %v459
  %v475 = vpack.c.b16 %v462, %v461
  %v476 = vpack.c.b16 %v464, %v463
  %v477 = vpack.c.b16 %v466, %v465
  %v478 = vpack.c.b16 %v468, %v467
  %v479 = vpack.c.b16 %v470, %v469
  %v480 = vpack.c.b16 %v472, %v471
  %489 = vmatpush.bf16.msra.mxu0 %v480
  %490 = vmatpush.bf16.msra.mxu0 %v479
  %491 = vmatpush.bf16.msra.mxu0 %v478
  %492 = vmatpush.bf16.msra.mxu0 %v477
  %493 = vmatpush.bf16.msra.mxu0 %v476
  %494 = vmatpush.bf16.msra.mxu0 %v475
  %495 = vmatpush.bf16.msra.mxu0 %v474
  %496 = vmatpush.bf16.msra.mxu0 %v473
  %497 = vmatmul.bf16.gmra.mxu0 %v423
  %v498 = vpop.f32.mrf.mxu0
  %v499 = vadd.f32 %v440, %v498
  %v500 = vpop.f32.mrf.mxu0
  %v501 = vadd.f32 %v440, %v500
  %502 = vdwg.mxu0
  %v503 = vmax.f32 %v499, 0.0
  %v504 = vmax.f32 %v501, 0.0
  %v505 = vpack.c.bf16 %v504, %v503
  %v506 = vld [vmem:[%s7] sm:$0xf]
  %v507 = vld [vmem:[%s7 + $0x4] sm:$0xf]
  %v508 = vld [vmem:[%s7 + $0x8] sm:$0xf]
  %v509 = vld [vmem:[%s7 + $0xc] sm:$0xf]
  %v510 = vld [vmem:[%s7 + $0x10] sm:$0xf]
  %v511 = vld [vmem:[%s7 + $0x14] sm:$0xf]
  %v512 = vld [vmem:[%s7 + $0x18] sm:$0xf]
  %v513 = vld [vmem:[%s7 + $0x1c] sm:$0xf]
  %v514 = vld [vmem:[%s7 + $0x20] sm:$0xf]
  %v515 = vld [vmem:[%s7 + $0x24] sm:$0xf]
  %v516 = vld [vmem:[%s7 + $0x28] sm:$0xf]
  %v517 = vld [vmem:[%s7 + $0x2c] sm:$0xf]
  %v518 = vld [vmem:[%s7 + $0x30] sm:$0xf]
  %v519 = vld [vmem:[%s7 + $0x34] sm:$0xf]
  %v520 = vld [vmem:[%s7 + $0x38] sm:$0xf]
  %v521 = vld [vmem:[%s7 + $0x3c] sm:$0xf]
  %v522 = vperm.slane %v342, 2
  %v539 = vunpack.c.l.b16 %v506
  %v540 = vunpack.c.l.b16 %v507
  %v541 = vunpack.c.l.b16 %v508
  %v542 = vunpack.c.l.b16 %v509
  %v543 = vunpack.c.l.b16 %v510
  %v544 = vunpack.c.l.b16 %v511
  %v545 = vunpack.c.l.b16 %v512
  %v546 = vunpack.c.l.b16 %v513
  %v547 = vunpack.c.l.b16 %v514
  %v548 = vunpack.c.l.b16 %v515
  %v549 = vunpack.c.l.b16 %v516
  %v550 = vunpack.c.l.b16 %v517
  %v551 = vunpack.c.l.b16 %v518
  %v552 = vunpack.c.l.b16 %v519
  %v553 = vunpack.c.l.b16 %v520
  %v554 = vunpack.c.l.b16 %v521
  %v555 = vpack.c.b16 %v540, %v539
  %v556 = vpack.c.b16 %v542, %v541
  %v557 = vpack.c.b16 %v544, %v543
  %v558 = vpack.c.b16 %v546, %v545
  %v559 = vpack.c.b16 %v548, %v547
  %v560 = vpack.c.b16 %v550, %v549
  %v561 = vpack.c.b16 %v552, %v551
  %v562 = vpack.c.b16 %v554, %v553
  %571 = vmatpush.bf16.msra.mxu0 %v562
  %572 = vmatpush.bf16.msra.mxu0 %v561
  %573 = vmatpush.bf16.msra.mxu0 %v560
  %574 = vmatpush.bf16.msra.mxu0 %v559
  %575 = vmatpush.bf16.msra.mxu0 %v558
  %576 = vmatpush.bf16.msra.mxu0 %v557
  %577 = vmatpush.bf16.msra.mxu0 %v556
  %578 = vmatpush.bf16.msra.mxu0 %v555
  %579 = vmatmul.bf16.gmra.mxu0 %v505
  %v580 = vpop.f32.mrf.mxu0
  %v581 = vadd.f32 %v522, %v580
  %v582 = vpop.f32.mrf.mxu0
  %v583 = vadd.f32 %v522, %v582
  %584 = vdwg.mxu0
  %v585 = vadd.f32 %v419, %v581
  %v586 = vadd.f32 %v421, %v583
  %587 = vadd.xlane.f32.xlu0 %v585
  %v588 = vpop.xlane.xlu0 %587
  %589 = vadd.xlane.f32.xlu0 %v586
  %v590 = vpop.xlane.xlu0 %589
  %v591 = vmul.f32 %v588, 0.020833334
  %v592 = vmul.f32 %v590, 0.020833334
  %v593 = vmul.f32 %v585, %v585
  %v594 = vmul.f32 %v586, %v586
  %595 = vadd.xlane.f32.xlu0 %v593
  %v596 = vpop.xlane.xlu0 %595
  %597 = vadd.xlane.f32.xlu0 %v594
  %v598 = vpop.xlane.xlu0 %597
  %v599 = vmul.f32 %v596, 0.020833334
  %v600 = vmul.f32 %v598, 0.020833334
  %v601 = vmul.f32 %v591, %v591
  %v602 = vmul.f32 %v592, %v592
  %v603 = vsub.f32 %v599, %v601
  %v604 = vsub.f32 %v600, %v602
  %v605 = vmax.f32 %v603, 0.0
  %v606 = vmax.f32 %v604, 0.0
  %v607 = vsub.f32 %v585, %v591
  %v608 = vsub.f32 %v586, %v592
  %v609 = vadd.f32 %v605, 1e-05
  %v610 = vadd.f32 %v606, 1e-05
  %v611 = vrsqrt.pop %v609
  %v612 = vmul.f32 %v611, %v609
  %v613 = vmul.f32 %v612, %v611
  %v614 = vmul.f32 0.5, %v613
  %v615 = vsub.f32 1.5, %v614
  %v616 = vmul.f32 %v611, %v615
  %vm617 = vweird.f32 %v609
  %vm618 = vweird.f32 %v611
  %vm619 = vmor %vm617, %vm618
  %v620 = vsel %vm619, %v611, %v616
  %v621 = vrsqrt.pop %v610
  %v622 = vmul.f32 %v621, %v610
  %v623 = vmul.f32 %v622, %v621
  %v624 = vmul.f32 0.5, %v623
  %v625 = vsub.f32 1.5, %v624
  %v626 = vmul.f32 %v621, %v625
  %vm627 = vweird.f32 %v610
  %vm628 = vweird.f32 %v621
  %vm629 = vmor %vm627, %vm628
  %v630 = vsel %vm629, %v621, %v626
  %v631 = vmul.f32 %v607, %v620
  %v632 = vmul.f32 %v608, %v630
  %v633 = vperm.slane %v342, 3
  %v634 = vmul.f32 %v631, %v633
  %v635 = vmul.f32 %v632, %v633
  %v636 = vperm.slane %v342, 4
  %v637 = vadd.f32 %v634, %v636
  %v638 = vadd.f32 %v635, %v636
  %v639 = vpack.c.bf16 %v638, %v637
  %v640 = vld [vmem:[%s9] sm:$0xf]
  %v641 = vld [vmem:[%s9 + $0x4] sm:$0xf]
  %v642 = vld [vmem:[%s9 + $0x8] sm:$0xf]
  %v643 = vld [vmem:[%s9 + $0xc] sm:$0xf]
  %v644 = vld [vmem:[%s9 + $0x10] sm:$0xf]
  %v645 = vld [vmem:[%s9 + $0x14] sm:$0xf]
  %v646 = vld [vmem:[%s9 + $0x18] sm:$0xf]
  %v647 = vld [vmem:[%s9 + $0x1c] sm:$0xf]
  %v648 = vld [vmem:[%s9 + $0x20] sm:$0xf]
  %v649 = vld [vmem:[%s9 + $0x24] sm:$0xf]
  %v650 = vld [vmem:[%s9 + $0x28] sm:$0xf]
  %v651 = vld [vmem:[%s9 + $0x2c] sm:$0xf]
  %v652 = vld [vmem:[%s9 + $0x30] sm:$0xf]
  %v653 = vld [vmem:[%s9 + $0x34] sm:$0xf]
  %v654 = vld [vmem:[%s9 + $0x38] sm:$0xf]
  %v655 = vld [vmem:[%s9 + $0x3c] sm:$0xf]
  %v656 = vld [vmem:[%s10] sm:$0x1]
  %v658 = vperm.slane %v656, 0
  %v676 = vunpack.c.l.b16 %v640
  %v677 = vunpack.c.l.b16 %v641
  %v678 = vunpack.c.l.b16 %v642
  %v679 = vunpack.c.l.b16 %v643
  %v680 = vunpack.c.l.b16 %v644
  %v681 = vunpack.c.l.b16 %v645
  %v682 = vunpack.c.l.b16 %v646
  %v683 = vunpack.c.l.b16 %v647
  %v684 = vunpack.c.l.b16 %v648
  %v685 = vunpack.c.l.b16 %v649
  %v686 = vunpack.c.l.b16 %v650
  %v687 = vunpack.c.l.b16 %v651
  %v688 = vunpack.c.l.b16 %v652
  %v689 = vunpack.c.l.b16 %v653
  %v690 = vunpack.c.l.b16 %v654
  %v691 = vunpack.c.l.b16 %v655
  %v692 = vpack.c.b16 %v677, %v676
  %v693 = vpack.c.b16 %v679, %v678
  %v694 = vpack.c.b16 %v681, %v680
  %v695 = vpack.c.b16 %v683, %v682
  %v696 = vpack.c.b16 %v685, %v684
  %v697 = vpack.c.b16 %v687, %v686
  %v698 = vpack.c.b16 %v689, %v688
  %v699 = vpack.c.b16 %v691, %v690
  %708 = vmatpush.bf16.msra.mxu0 %v699
  %709 = vmatpush.bf16.msra.mxu0 %v698
  %710 = vmatpush.bf16.msra.mxu0 %v697
  %711 = vmatpush.bf16.msra.mxu0 %v696
  %712 = vmatpush.bf16.msra.mxu0 %v695
  %713 = vmatpush.bf16.msra.mxu0 %v694
  %714 = vmatpush.bf16.msra.mxu0 %v693
  %715 = vmatpush.bf16.msra.mxu0 %v692
  %716 = vmatmul.bf16.gmra.mxu0 %v639
  %v717 = vpop.f32.mrf.mxu0
  %v718 = vadd.f32 %v658, %v717
  %v719 = vpop.f32.mrf.mxu0
  %v720 = vadd.f32 %v658, %v719
  %721 = vdwg.mxu0
  %722 = vst [vmem:[%s11] sm:$0xff] %v718
  %723 = vst [vmem:[%s11 + $0x8] sm:$0xff] %v720
  // Predicated region
  $region46: #{mlp_forward.1} parent=0 // pred_check
    _
  $region47: #{mlp_forward.1} parent=0 // pred_check_branch
    %725 = sbr.rel (0) target = $region49
  $region48: #{mlp_forward.1} parent=0 // pred_region
    _
  $region49: #{mlp_forward.1} parent=0 // pred_fallthru
    _
  // Predicated region
  $region50: #{mlp_forward.1} parent=0 // pred_check
    _
  $region51: #{mlp_forward.1} parent=0 // pred_check_branch
    %727 = sbr.rel (0) target = $region53
  $region52: #{mlp_forward.1} parent=0 // pred_region
    _
  $region53: #{mlp_forward.1} parent=0 // pred_fallthru
    _

</llo_original>
